<compile_context>
chip_gen: v5e
topology: v5e:2x2
jax: 0.10.0
libtpu: 0.0.40
codegen_flags: <defaults>
</compile_context>

<pallas_src>
import functools

import jax
import jax.numpy as jnp
from jax import lax
from jax.experimental import pallas as pl
from jax.experimental.pallas import tpu as pltpu


# ---------------------------------------------------------------------------
# Fused EBlock kernel: all ResBlocks for one lane-block of images.
# ---------------------------------------------------------------------------
def _eblock_kernel(x_ref, w_ref, b_ref, o_ref, apad_ref, hpad_ref,
                   *, H, L, num_res):
    # x_ref : (H, L)                lane-dense activation slab (L = G*C*W = 128)
    # w_ref : (num_res*2*3, L, L)   banded weight slab (r, conv k, kh) at
    #                               row (r*2 + k)*3 + kh
    # b_ref : (num_res*2, 1, L)     bias row for (r, conv k) at row r*2 + k
    # apad_ref / hpad_ref : (H+2, L) f32 VMEM scratch; rows 0 and H+1 are the
    #                               zero halo that implements 'same' H-padding.
    f32 = jnp.float32
    zrow = jnp.zeros((1, L), f32)

    # Zero ONLY the halo rows (interiors are fully rewritten below).  Done
    # unconditionally every step so it is safe under megacore grid sharding.
    apad_ref[0:1, :] = zrow
    apad_ref[H + 1:H + 2, :] = zrow
    hpad_ref[0:1, :] = zrow
    hpad_ref[H + 1:H + 2, :] = zrow

    apad_ref[1:H + 1, :] = x_ref[...].astype(f32)

    def conv3x3(src_ref, cidx):
        # 3 full-lane MXU dots: (H,128) x (128,128).  The (128,128) band
        # matrix already contains the W-taps, channel mix, W zero-padding and
        # the per-image block-diagonal structure.
        acc = jnp.zeros((H, L), f32)
        for kh in range(3):                                  # static unroll (3)
            acc = acc + jnp.dot(src_ref[kh:kh + H, :],
                                w_ref[cidx * 3 + kh],
                                preferred_element_type=f32)
        return acc + b_ref[cidx]                             # (1, L) broadcast

    def body(r, carry):
        # conv1 + bias + ReLU
        h = jnp.maximum(conv3x3(apad_ref, 2 * r), 0.0)
        hpad_ref[1:H + 1, :] = h
        # conv2 + bias + residual (residual = resident activation interior)
        y = conv3x3(hpad_ref, 2 * r + 1)
        apad_ref[1:H + 1, :] = y + apad_ref[1:H + 1, :]
        return carry

    lax.fori_loop(0, num_res, body, 0)

    o_ref[...] = apad_ref[1:H + 1, :].astype(o_ref.dtype)    # full-lane store


# ---------------------------------------------------------------------------
# Host-side weight packing (do once; weights then stay VMEM-resident).
# ---------------------------------------------------------------------------
def _lane_group(C, W):
    lw = C * W
    g = max(1, 128 // lw)
    if (g * lw) % 128 != 0:
        raise ValueError(
            f"C*W={lw} must divide 128 (or be a multiple of 128) for the "
            "lane-dense packing used by this kernel.")
    return g


def pack_eblock_params(params, *, C, W):
    """Pack raw OIHW conv weights into banded, lane-dense matmul operands.

    Returns:
      w_all: (num_res*2*3, L, L) f32, slab for (r, conv k, kh) at (r*2+k)*3+kh
      b_all: (num_res*2, 1, L)  f32, bias row for (r, conv k) at r*2+k
    where L = G*C*W and G images share one 128-lane block.
    """
    G = _lane_group(C, W)
    wi = jnp.arange(W)[:, None]
    wo = jnp.arange(W)[None, :]
    kw = wi - wo + 1                                    # W-direction tap index
    valid = ((kw >= 0) & (kw <= 2)).astype(jnp.float32)  # folds W zero-padding
    kwc = jnp.clip(kw, 0, 2)
    eye_g = jnp.eye(G, dtype=jnp.float32)

    def band_mats(wt):                                  # wt: (Cout, Cin, 3, 3)
        mats = []
        for kh in range(3):
            wk = wt[:, :, kh, :]                        # (co, ci, kw)
            t = wk[:, :, kwc] * valid[None, None]       # (co, ci, wi, wo)
            t = jnp.transpose(t, (1, 2, 0, 3)).reshape(C * W, C * W)
            mats.append(jnp.kron(eye_g, t))             # block-diag over images
        return mats

    w_list, b_list = [], []
    for p in params:
        for wt, b in ((p["w1"], p["b1"]), (p["w2"], p["b2"])):
            w_list += band_mats(jnp.asarray(wt, jnp.float32))
            b_list.append(jnp.tile(jnp.repeat(jnp.asarray(b, jnp.float32), W), G))
    return jnp.stack(w_list), jnp.stack(b_list)[:, None, :]


# ---------------------------------------------------------------------------
# Forward wrappers
# ---------------------------------------------------------------------------
def eblock_forward_packed(x_nchw, w_all, b_all):
    """Fused EBlock on prepacked weights. NCHW in, NCHW out."""
    N, C, H, W = x_nchw.shape
    L = w_all.shape[-1]
    G = L // (C * W)
    num_res = w_all.shape[0] // 6
    assert L == G * C * W and L % 128 == 0
    assert b_all.shape == (num_res * 2, 1, L)

    n_orig = N
    if N % G:                      # pad batch to a multiple of the lane group
        pad = G - N % G
        x_nchw = jnp.concatenate(
            [x_nchw, jnp.zeros((pad,) + x_nchw.shape[1:], x_nchw.dtype)], 0)
        N += pad

    # NCHW -> lane-dense (H, N*C*W); lane index = (image, channel, w).
    x2 = jnp.transpose(x_nchw, (2, 0, 1, 3)).reshape(H, N * C * W)

    steps = N // G
    kern = functools.partial(_eblock_kernel, H=H, L=L, num_res=num_res)
    y2 = pl.pallas_call(
        kern,
        out_shape=jax.ShapeDtypeStruct((H, N * C * W), x_nchw.dtype),
        grid_spec=pltpu.PrefetchScalarGridSpec(
            num_scalar_prefetch=0,
            grid=(steps,),
            in_specs=[pl.BlockSpec((H, L), lambda i: (0, i)),
                      pl.BlockSpec((num_res * 6, L, L), lambda i: (0, 0, 0)),
                      pl.BlockSpec((num_res * 2, 1, L), lambda i: (0, 0, 0))],
            out_specs=pl.BlockSpec((H, L), lambda i: (0, i)),
            scratch_shapes=[pltpu.VMEM((H + 2, L), jnp.float32),
                            pltpu.VMEM((H + 2, L), jnp.float32)]),
        compiler_params=pltpu.CompilerParams(
            dimension_semantics=("parallel",)),
    )(x2, w_all, b_all)

    y = jnp.transpose(y2.reshape(H, N, C, W), (1, 2, 0, 3))
    return y[:n_orig]


def eblock_forward(x_nchw, params):
    """EBlock.forward matching the PyTorch module (packs weights on the fly)."""
    _, C, _, W = x_nchw.shape
    w_all, b_all = pack_eblock_params(params, C=C, W=W)
    return eblock_forward_packed(x_nchw, w_all, b_all)


# ---------------------------------------------------------------------------
# Pure-JAX reference (correctness check only)
# ---------------------------------------------------------------------------
def _reference(x_nchw, params):
    dn = ("NCHW", "OIHW", "NCHW")
    x = x_nchw
    for p in params:
        h = lax.conv_general_dilated(x, p["w1"], (1, 1), "SAME",
                                     dimension_numbers=dn)
        h = jnp.maximum(h + p["b1"][None, :, None, None], 0.0)
        h = lax.conv_general_dilated(h, p["w2"], (1, 1), "SAME",
                                     dimension_numbers=dn)
        h = h + p["b2"][None, :, None, None]
        x = h + x
    return x


# ---------------------------------------------------------------------------
if __name__ == "__main__":
    N, C, H, W = 2, 4, 16, 16      # small NCHW input, like the torch module
    num_res = 2                    # small EBlock (module default is 8)

    key = jax.random.PRNGKey(0)
    key, kx = jax.random.split(key)
    x = jax.random.normal(kx, (N, C, H, W), jnp.float32)

    # Deterministic param init (PyTorch Conv2d default: U(-1/sqrt(fan_in),...))
    bound = 1.0 / float((C * 9) ** 0.5)
    params = []
    for _ in range(num_res):
        key, k1, k2, k3, k4 = jax.random.split(key, 5)
        params.append(dict(
            w1=jax.random.uniform(k1, (C, C, 3, 3), jnp.float32, -bound, bound),
            b1=jax.random.uniform(k2, (C,), jnp.float32, -bound, bound),
            w2=jax.random.uniform(k3, (C, C, 3, 3), jnp.float32, -bound, bound),
            b2=jax.random.uniform(k4, (C,), jnp.float32, -bound, bound),
        ))

    # Pack weights once host-side; the jitted forward only does layout
    # plumbing + one pallas_call.
    w_all, b_all = pack_eblock_params(params, C=C, W=W)
    fwd = jax.jit(eblock_forward_packed)
    out = jax.block_until_ready(fwd(x, w_all, b_all))
    assert out.shape == (N, C, H, W) and out.dtype == jnp.float32

    ref = jax.block_until_ready(_reference(x, params))
    assert jnp.allclose(out, ref, atol=1e-3, rtol=1e-3), \
        "mismatch vs JAX conv reference"

    print("KERNEL_OK")
</pallas_src>

<mosaic_0001>
module attributes {stable_mosaic.version = 11 : i64} {
  func.func @_eblock_kernel(%arg0: i32, %arg1: memref<16x128xf32, #tpu.memory_space<vmem>>, %arg2: memref<12x128x128xf32, #tpu.memory_space<vmem>>, %arg3: memref<4x1x128xf32, #tpu.memory_space<vmem>>, %arg4: memref<16x128xf32, #tpu.memory_space<vmem>>, %arg5: memref<18x128xf32, #tpu.memory_space<vmem>>, %arg6: memref<18x128xf32, #tpu.memory_space<vmem>>) attributes {dimension_semantics = [#tpu.dimension_semantics<parallel>], iteration_bounds = array<i64: 1>, scalar_prefetch = 0 : i64, scratch_operands = 2 : i64, tpu.core_type = #tpu.core_type<tc>, window_params = [{transform_indices = @transform_0, window_bounds = array<i64: 16, 128>}, {pipeline_mode = #tpu.pipeline_mode<synchronous>, transform_indices = @transform_1, window_bounds = array<i64: 12, 128, 128>}, {pipeline_mode = #tpu.pipeline_mode<synchronous>, transform_indices = @transform_2, window_bounds = array<i64: 4, 1, 128>}, {transform_indices = @transform_3, window_bounds = array<i64: 16, 128>}]} {
    %cst = arith.constant 0.000000e+00 : f32
    %0 = vector.broadcast %cst : f32 to vector<1x128xf32>
    %c0 = arith.constant 0 : index
    %c0_0 = arith.constant 0 : index
    %1 = vector.load %arg5[%c0, %c0_0] : memref<18x128xf32, #tpu.memory_space<vmem>>, vector<1x128xf32>
    tpu.vector_store %arg5[%c0, %c0_0], %0 {strides = array<i32>} : memref<18x128xf32, #tpu.memory_space<vmem>>, vector<1x128xf32>,
    %c17 = arith.constant 17 : index
    %c0_1 = arith.constant 0 : index
    %2 = vector.load %arg5[%c17, %c0_1] : memref<18x128xf32, #tpu.memory_space<vmem>>, vector<1x128xf32>
    tpu.vector_store %arg5[%c17, %c0_1], %0 {strides = array<i32>} : memref<18x128xf32, #tpu.memory_space<vmem>>, vector<1x128xf32>,
    %c0_2 = arith.constant 0 : index
    %c0_3 = arith.constant 0 : index
    %3 = vector.load %arg6[%c0_2, %c0_3] : memref<18x128xf32, #tpu.memory_space<vmem>>, vector<1x128xf32>
    tpu.vector_store %arg6[%c0_2, %c0_3], %0 {strides = array<i32>} : memref<18x128xf32, #tpu.memory_space<vmem>>, vector<1x128xf32>,
    %c17_4 = arith.constant 17 : index
    %c0_5 = arith.constant 0 : index
    %4 = vector.load %arg6[%c17_4, %c0_5] : memref<18x128xf32, #tpu.memory_space<vmem>>, vector<1x128xf32>
    tpu.vector_store %arg6[%c17_4, %c0_5], %0 {strides = array<i32>} : memref<18x128xf32, #tpu.memory_space<vmem>>, vector<1x128xf32>,
    %c0_6 = arith.constant 0 : index
    %c0_7 = arith.constant 0 : index
    %5 = vector.load %arg1[%c0_6, %c0_7] : memref<16x128xf32, #tpu.memory_space<vmem>>, vector<16x128xf32>
    %c1 = arith.constant 1 : index
    %c0_8 = arith.constant 0 : index
    %6 = vector.load %arg5[%c1, %c0_8] : memref<18x128xf32, #tpu.memory_space<vmem>>, vector<16x128xf32>
    tpu.vector_store %arg5[%c1, %c0_8], %5 {strides = array<i32>} : memref<18x128xf32, #tpu.memory_space<vmem>>, vector<16x128xf32>,
    %c0_i32 = arith.constant 0 : i32
    %c2_i32 = arith.constant 2 : i32
    %7 = arith.addi %c0_i32, %c2_i32 : i32
    %c1_i32 = arith.constant 1 : i32
    scf.for %arg7 = %c0_i32 to %7 step %c1_i32  : i32 {
      %c2_i32_14 = arith.constant 2 : i32
      %10 = arith.muli %c2_i32_14, %arg7 : i32
      %cst_15 = arith.constant 0.000000e+00 : f32
      %11 = vector.broadcast %cst_15 : f32 to vector<16x128xf32>
      %c0_16 = arith.constant 0 : index
      %c0_17 = arith.constant 0 : index
      %12 = vector.load %arg5[%c0_16, %c0_17] : memref<18x128xf32, #tpu.memory_space<vmem>>, vector<16x128xf32>
      %c3_i32 = arith.constant 3 : i32
      %13 = arith.muli %10, %c3_i32 : i32
      %c0_i32_18 = arith.constant 0 : i32
      %14 = arith.addi %13, %c0_i32_18 : i32
      %15 = arith.index_cast %14 : i32 to index
      %c0_19 = arith.constant 0 : index
      %c0_20 = arith.constant 0 : index
      %16 = vector.load %arg2[%15, %c0_19, %c0_20] : memref<12x128x128xf32, #tpu.memory_space<vmem>>, vector<1x128x128xf32>
      %17 = vector.shape_cast %16 : vector<1x128x128xf32> to vector<128x128xf32>
      %cst_21 = arith.constant dense<0.000000e+00> : vector<16x128xf32>
      %18 = tpu.matmul %12, %17, %cst_21 {dimension_numbers = #tpu.dot_dimension_numbers<[1], [0], [0], [1], [0, 0, 1, 1], [], []>} : vector<16x128xf32>, vector<128x128xf32>, vector<16x128xf32> -> vector<16x128xf32>
      %19 = arith.addf %11, %18 : vector<16x128xf32>
      %c1_22 = arith.constant 1 : index
      %c0_23 = arith.constant 0 : index
      %20 = vector.load %arg5[%c1_22, %c0_23] : memref<18x128xf32, #tpu.memory_space<vmem>>, vector<16x128xf32>
      %c3_i32_24 = arith.constant 3 : i32
      %21 = arith.muli %10, %c3_i32_24 : i32
      %c1_i32_25 = arith.constant 1 : i32
      %22 = arith.addi %21, %c1_i32_25 : i32
      %23 = arith.index_cast %22 : i32 to index
      %c0_26 = arith.constant 0 : index
      %c0_27 = arith.constant 0 : index
      %24 = vector.load %arg2[%23, %c0_26, %c0_27] : memref<12x128x128xf32, #tpu.memory_space<vmem>>, vector<1x128x128xf32>
      %25 = vector.shape_cast %24 : vector<1x128x128xf32> to vector<128x128xf32>
      %cst_28 = arith.constant dense<0.000000e+00> : vector<16x128xf32>
      %26 = tpu.matmul %20, %25, %cst_28 {dimension_numbers = #tpu.dot_dimension_numbers<[1], [0], [0], [1], [0, 0, 1, 1], [], []>} : vector<16x128xf32>, vector<128x128xf32>, vector<16x128xf32> -> vector<16x128xf32>
      %27 = arith.addf %19, %26 : vector<16x128xf32>
      %c2 = arith.constant 2 : index
      %c0_29 = arith.constant 0 : index
      %28 = vector.load %arg5[%c2, %c0_29] : memref<18x128xf32, #tpu.memory_space<vmem>>, vector<16x128xf32>
      %c3_i32_30 = arith.constant 3 : i32
      %29 = arith.muli %10, %c3_i32_30 : i32
      %c2_i32_31 = arith.constant 2 : i32
      %30 = arith.addi %29, %c2_i32_31 : i32
      %31 = arith.index_cast %30 : i32 to index
      %c0_32 = arith.constant 0 : index
      %c0_33 = arith.constant 0 : index
      %32 = vector.load %arg2[%31, %c0_32, %c0_33] : memref<12x128x128xf32, #tpu.memory_space<vmem>>, vector<1x128x128xf32>
      %33 = vector.shape_cast %32 : vector<1x128x128xf32> to vector<128x128xf32>
      %cst_34 = arith.constant dense<0.000000e+00> : vector<16x128xf32>
      %34 = tpu.matmul %28, %33, %cst_34 {dimension_numbers = #tpu.dot_dimension_numbers<[1], [0], [0], [1], [0, 0, 1, 1], [], []>} : vector<16x128xf32>, vector<128x128xf32>, vector<16x128xf32> -> vector<16x128xf32>
      %35 = arith.addf %27, %34 : vector<16x128xf32>
      %36 = arith.index_cast %10 : i32 to index
      %c0_35 = arith.constant 0 : index
      %c0_36 = arith.constant 0 : index
      %37 = vector.load %arg3[%36, %c0_35, %c0_36] : memref<4x1x128xf32, #tpu.memory_space<vmem>>, vector<1x1x128xf32>
      %38 = vector.shape_cast %37 : vector<1x1x128xf32> to vector<1x128xf32>
      %39 = vector.broadcast %38 : vector<1x128xf32> to vector<16x128xf32>
      %40 = arith.addf %35, %39 : vector<16x128xf32>
      %cst_37 = arith.constant 0.000000e+00 : f32
      %41 = vector.broadcast %cst_37 : f32 to vector<16x128xf32>
      %42 = arith.maximumf %40, %41 : vector<16x128xf32>
      %c1_38 = arith.constant 1 : index
      %c0_39 = arith.constant 0 : index
      %43 = vector.load %arg6[%c1_38, %c0_39] : memref<18x128xf32, #tpu.memory_space<vmem>>, vector<16x128xf32>
      tpu.vector_store %arg6[%c1_38, %c0_39], %42 {strides = array<i32>} : memref<18x128xf32, #tpu.memory_space<vmem>>, vector<16x128xf32>,
      %c2_i32_40 = arith.constant 2 : i32
      %44 = arith.muli %c2_i32_40, %arg7 : i32
      %c1_i32_41 = arith.constant 1 : i32
      %45 = arith.addi %44, %c1_i32_41 : i32
      %cst_42 = arith.constant 0.000000e+00 : f32
      %46 = vector.broadcast %cst_42 : f32 to vector<16x128xf32>
      %c0_43 = arith.constant 0 : index
      %c0_44 = arith.constant 0 : index
      %47 = vector.load %arg6[%c0_43, %c0_44] : memref<18x128xf32, #tpu.memory_space<vmem>>, vector<16x128xf32>
      %c3_i32_45 = arith.constant 3 : i32
      %48 = arith.muli %45, %c3_i32_45 : i32
      %c0_i32_46 = arith.constant 0 : i32
      %49 = arith.addi %48, %c0_i32_46 : i32
      %50 = arith.index_cast %49 : i32 to index
      %c0_47 = arith.constant 0 : index
      %c0_48 = arith.constant 0 : index
      %51 = vector.load %arg2[%50, %c0_47, %c0_48] : memref<12x128x128xf32, #tpu.memory_space<vmem>>, vector<1x128x128xf32>
      %52 = vector.shape_cast %51 : vector<1x128x128xf32> to vector<128x128xf32>
      %cst_49 = arith.constant dense<0.000000e+00> : vector<16x128xf32>
      %53 = tpu.matmul %47, %52, %cst_49 {dimension_numbers = #tpu.dot_dimension_numbers<[1], [0], [0], [1], [0, 0, 1, 1], [], []>} : vector<16x128xf32>, vector<128x128xf32>, vector<16x128xf32> -> vector<16x128xf32>
      %54 = arith.addf %46, %53 : vector<16x128xf32>
      %c1_50 = arith.constant 1 : index
      %c0_51 = arith.constant 0 : index
      %55 = vector.load %arg6[%c1_50, %c0_51] : memref<18x128xf32, #tpu.memory_space<vmem>>, vector<16x128xf32>
      %c3_i32_52 = arith.constant 3 : i32
      %56 = arith.muli %45, %c3_i32_52 : i32
      %c1_i32_53 = arith.constant 1 : i32
      %57 = arith.addi %56, %c1_i32_53 : i32
      %58 = arith.index_cast %57 : i32 to index
      %c0_54 = arith.constant 0 : index
      %c0_55 = arith.constant 0 : index
      %59 = vector.load %arg2[%58, %c0_54, %c0_55] : memref<12x128x128xf32, #tpu.memory_space<vmem>>, vector<1x128x128xf32>
      %60 = vector.shape_cast %59 : vector<1x128x128xf32> to vector<128x128xf32>
      %cst_56 = arith.constant dense<0.000000e+00> : vector<16x128xf32>
      %61 = tpu.matmul %55, %60, %cst_56 {dimension_numbers = #tpu.dot_dimension_numbers<[1], [0], [0], [1], [0, 0, 1, 1], [], []>} : vector<16x128xf32>, vector<128x128xf32>, vector<16x128xf32> -> vector<16x128xf32>
      %62 = arith.addf %54, %61 : vector<16x128xf32>
      %c2_57 = arith.constant 2 : index
      %c0_58 = arith.constant 0 : index
      %63 = vector.load %arg6[%c2_57, %c0_58] : memref<18x128xf32, #tpu.memory_space<vmem>>, vector<16x128xf32>
      %c3_i32_59 = arith.constant 3 : i32
      %64 = arith.muli %45, %c3_i32_59 : i32
      %c2_i32_60 = arith.constant 2 : i32
      %65 = arith.addi %64, %c2_i32_60 : i32
      %66 = arith.index_cast %65 : i32 to index
      %c0_61 = arith.constant 0 : index
      %c0_62 = arith.constant 0 : index
      %67 = vector.load %arg2[%66, %c0_61, %c0_62] : memref<12x128x128xf32, #tpu.memory_space<vmem>>, vector<1x128x128xf32>
      %68 = vector.shape_cast %67 : vector<1x128x128xf32> to vector<128x128xf32>
      %cst_63 = arith.constant dense<0.000000e+00> : vector<16x128xf32>
      %69 = tpu.matmul %63, %68, %cst_63 {dimension_numbers = #tpu.dot_dimension_numbers<[1], [0], [0], [1], [0, 0, 1, 1], [], []>} : vector<16x128xf32>, vector<128x128xf32>, vector<16x128xf32> -> vector<16x128xf32>
      %70 = arith.addf %62, %69 : vector<16x128xf32>
      %71 = arith.index_cast %45 : i32 to index
      %c0_64 = arith.constant 0 : index
      %c0_65 = arith.constant 0 : index
      %72 = vector.load %arg3[%71, %c0_64, %c0_65] : memref<4x1x128xf32, #tpu.memory_space<vmem>>, vector<1x1x128xf32>
      %73 = vector.shape_cast %72 : vector<1x1x128xf32> to vector<1x128xf32>
      %74 = vector.broadcast %73 : vector<1x128xf32> to vector<16x128xf32>
      %75 = arith.addf %70, %74 : vector<16x128xf32>
      %c1_66 = arith.constant 1 : index
      %c0_67 = arith.constant 0 : index
      %76 = vector.load %arg5[%c1_66, %c0_67] : memref<18x128xf32, #tpu.memory_space<vmem>>, vector<16x128xf32>
      %77 = arith.addf %75, %76 : vector<16x128xf32>
      %c1_68 = arith.constant 1 : index
      %c0_69 = arith.constant 0 : index
      %78 = vector.load %arg5[%c1_68, %c0_69] : memref<18x128xf32, #tpu.memory_space<vmem>>, vector<16x128xf32>
      tpu.vector_store %arg5[%c1_68, %c0_69], %77 {strides = array<i32>} : memref<18x128xf32, #tpu.memory_space<vmem>>, vector<16x128xf32>,
    }
    %c2_i32_9 = arith.constant 2 : i32
    %c1_10 = arith.constant 1 : index
    %c0_11 = arith.constant 0 : index
    %8 = vector.load %arg5[%c1_10, %c0_11] : memref<18x128xf32, #tpu.memory_space<vmem>>, vector<16x128xf32>
    %c0_12 = arith.constant 0 : index
    %c0_13 = arith.constant 0 : index
    %9 = vector.load %arg4[%c0_12, %c0_13] : memref<16x128xf32, #tpu.memory_space<vmem>>, vector<16x128xf32>
    tpu.vector_store %arg4[%c0_12, %c0_13], %8 {strides = array<i32>} : memref<16x128xf32, #tpu.memory_space<vmem>>, vector<16x128xf32>,
    return
  }
  func.func @transform_0(%arg0: i32) -> (i32, i32) {
    %c0_i32 = arith.constant 0 : i32
    %c0_i32_0 = arith.constant 0 : i32
    return %c0_i32, %arg0 : i32, i32
  }
  func.func @transform_1(%arg0: i32) -> (i32, i32, i32) {
    %c0_i32 = arith.constant 0 : i32
    %c0_i32_0 = arith.constant 0 : i32
    %c0_i32_1 = arith.constant 0 : i32
    %c0_i32_2 = arith.constant 0 : i32
    return %c0_i32, %c0_i32_0, %c0_i32_1 : i32, i32, i32
  }
  func.func @transform_2(%arg0: i32) -> (i32, i32, i32) {
    %c0_i32 = arith.constant 0 : i32
    %c0_i32_0 = arith.constant 0 : i32
    %c0_i32_1 = arith.constant 0 : i32
    %c0_i32_2 = arith.constant 0 : i32
    return %c0_i32, %c0_i32_0, %c0_i32_1 : i32, i32, i32
  }
  func.func @transform_3(%arg0: i32) -> (i32, i32) {
    %c0_i32 = arith.constant 0 : i32
    %c0_i32_0 = arith.constant 0 : i32
    return %c0_i32, %arg0 : i32, i32
  }
}

</mosaic_0001>

<llo_original>
// kernel: eblock_forward_packed.1
$region0: #{eblock_forward_packed.1}
  #allocation0 [shape = 'u32[]', space=smem, size = 0x4, offset = 0x4, fixed_abs, tag = 'smem constant byte address 0x4 - core index']
  #allocation1 [shape = 'u32[72,128]{1,0:T(1,128)}', space=vmem, size = 0x9000, scoped, tag = 'internal scratch']
  #allocation2 [shape = 'f32[18,128]{1,0:T(8,128)}', space=vmem, size = 0x3000, scoped, tag = 'scratch operand']
  #allocation3 [shape = 'f32[18,128]{1,0:T(8,128)}', space=vmem, size = 0x3000, scoped, tag = 'scratch operand']
  %s0 = inlined_call_operand.vmem [shape: f32[16,128], index: 0, kind: input, shape index: {}]
  %s1 = inlined_call_operand.hbm [shape: f32[12,128,128], index: 1, kind: input, shape index: {}]
  %s2 = inlined_call_operand.vmem [shape: f32[4,1,128], index: 2, kind: input, shape index: {}]
  %s3 = inlined_call_operand.vmem [shape: f32[16,128], index: 3, kind: output, shape index: {}]
  %s4 = sld [smem:[#allocation0]]
  $region33: #{eblock_forward_packed.1} parent=0
    _
  %s6 = ssub.s32 1, %s4
  %s7 = scalar_select 0, %s6, %s4
  $region1: #{eblock_forward_packed.1} parent=0
    #allocation4 [shape = 'u8[786432]{0}', space=vmem, size = 0xc0000, scoped, tag = 'input window, operand 1, single buffered']
    #allocation5 [shape = 's32[1]{0}', space=sflag, size = 0x4, scoped, tag = 'scoped memory for eblock_forward_packed.1']
    %8 = vsyncpa [#allocation5], 0
    // Predicated region
    $region2: #{eblock_forward_packed.1} parent=1 // pred_check
      _
    $region3: #{eblock_forward_packed.1} parent=1 // pred_check_branch
      %10 = sbr.rel (0) target = $region5
    $region4: #{eblock_forward_packed.1} parent=1 // pred_region
      _
    $region5: #{eblock_forward_packed.1} parent=1 // pred_fallthru
      _
    // Predicated region
    $region6: #{eblock_forward_packed.1} parent=1 // pred_check
      _
    $region7: #{eblock_forward_packed.1} parent=1 // pred_check_branch
      %12 = sbr.rel (0) target = $region9
    $region8: #{eblock_forward_packed.1} parent=1 // pred_region
      %14 = vsyncadd [#allocation5], 0
      %s15 = sshll.u32 %s1, 4
      %s16 = int_to_ptr.hbm [resolvable:$true] %s15
      %s17 = sshll.u32 [#allocation4], 4
      %s18 = int_to_ptr.vmem [resolvable:$true] %s17
      %23 = dma.hbm_to_vmem [thread:$0]  %s16, 24576, %s18, [#allocation5], 128, 128, 8
    $region9: #{eblock_forward_packed.1} parent=1 // pred_fallthru
      _
    // Predicated region
    $region10: #{eblock_forward_packed.1} parent=1 // pred_check
      _
    $region11: #{eblock_forward_packed.1} parent=1 // pred_check_branch
      %25 = sbr.rel (0) target = $region13
    $region12: #{eblock_forward_packed.1} parent=1 // pred_region
      _
    $region13: #{eblock_forward_packed.1} parent=1 // pred_fallthru
      _
    // Predicated region
    $region14: #{eblock_forward_packed.1} parent=1 // pred_check
      _
    $region15: #{eblock_forward_packed.1} parent=1 // pred_check_branch
      %27 = sbr.rel (0) target = $region17
    $region16: #{eblock_forward_packed.1} parent=1 // pred_region
      %29 = dma.done [#allocation5], 24576
    $region17: #{eblock_forward_packed.1} parent=1 // pred_fallthru
      _
    %30 = vst [vmem:[#allocation2] sm:$0x1] 0.0
    %31 = vst [vmem:[#allocation2 + $0x11] sm:$0x1] 0.0
    %32 = vst [vmem:[#allocation3] sm:$0x1] 0.0
    %33 = vst [vmem:[#allocation3 + $0x11] sm:$0x1] 0.0
    %v34 = vld [vmem:[%s0] sm:$0xff]
    %v35 = vld [vmem:[%s0 + $0x8] sm:$0xff]
    %36 = vst [vmem:[#allocation2 + $0x1] sm:$0xff] %v34
    %37 = vst [vmem:[#allocation2 + $0x9] sm:$0xff] %v35
    loop: start=0, step=1, limit=2
    $region18: #{eblock_forward_packed.1} parent=1 // loop_pre_header
      _
    $region19: #{eblock_forward_packed.1} parent=1 // loop_header
      %s39 = sphi 0, %s43
      %p40 = scmp.ge.s32.totalorder %s39, 2
    $region20: #{eblock_forward_packed.1} parent=1 // loop_header_branch
      %42 = sbr.rel (%p40) target = $region24
    $region21: #{eblock_forward_packed.1} parent=1 // loop_body
      %s44 = smul.u32 %s39, 2
      %v45 = vld [vmem:[#allocation2] sm:$0xff]
      %v46 = vld [vmem:[#allocation2 + $0x8] sm:$0xff]
      %s47 = smul.u32 %s39, 6
      %s48 = smul.u32 %s47, 128
      %s49 = scalar_lea.vmem [#allocation4], %s48
      %v50 = vld [vmem:[%s49] sm:$0xff]
      %v51 = vld [vmem:[%s49 + $0x8] sm:$0xff]
      %v52 = vld [vmem:[%s49 + $0x10] sm:$0xff]
      %v53 = vld [vmem:[%s49 + $0x18] sm:$0xff]
      %v54 = vld [vmem:[%s49 + $0x20] sm:$0xff]
      %v55 = vld [vmem:[%s49 + $0x28] sm:$0xff]
      %v56 = vld [vmem:[%s49 + $0x30] sm:$0xff]
      %v57 = vld [vmem:[%s49 + $0x38] sm:$0xff]
      %v58 = vld [vmem:[%s49 + $0x40] sm:$0xff]
      %v59 = vld [vmem:[%s49 + $0x48] sm:$0xff]
      %v60 = vld [vmem:[%s49 + $0x50] sm:$0xff]
      %v61 = vld [vmem:[%s49 + $0x58] sm:$0xff]
      %v62 = vld [vmem:[%s49 + $0x60] sm:$0xff]
      %v63 = vld [vmem:[%s49 + $0x68] sm:$0xff]
      %v64 = vld [vmem:[%s49 + $0x70] sm:$0xff]
      %v65 = vld [vmem:[%s49 + $0x78] sm:$0xff]
      %v66 = vld [vmem:[#allocation2 + $0x1] sm:$0xff]
      %v67 = vld [vmem:[#allocation2 + $0x9] sm:$0xff]
      %s68 = sadd.s32 %s47, 1
      %s69 = smul.u32 %s68, 128
      %s70 = scalar_lea.vmem [#allocation4], %s69
      %v71 = vld [vmem:[%s70] sm:$0xff]
      %v72 = vld [vmem:[%s70 + $0x8] sm:$0xff]
      %v73 = vld [vmem:[%s70 + $0x10] sm:$0xff]
      %v74 = vld [vmem:[%s70 + $0x18] sm:$0xff]
      %v75 = vld [vmem:[%s70 + $0x20] sm:$0xff]
      %v76 = vld [vmem:[%s70 + $0x28] sm:$0xff]
      %v77 = vld [vmem:[%s70 + $0x30] sm:$0xff]
      %v78 = vld [vmem:[%s70 + $0x38] sm:$0xff]
      %v79 = vld [vmem:[%s70 + $0x40] sm:$0xff]
      %v80 = vld [vmem:[%s70 + $0x48] sm:$0xff]
      %v81 = vld [vmem:[%s70 + $0x50] sm:$0xff]
      %v82 = vld [vmem:[%s70 + $0x58] sm:$0xff]
      %v83 = vld [vmem:[%s70 + $0x60] sm:$0xff]
      %v84 = vld [vmem:[%s70 + $0x68] sm:$0xff]
      %v85 = vld [vmem:[%s70 + $0x70] sm:$0xff]
      %v86 = vld [vmem:[%s70 + $0x78] sm:$0xff]
      %87 = vmatpush.msra.mxu0 %v86
      %88 = vmatpush.msra.mxu0 %v85
      %89 = vmatpush.msra.mxu0 %v84
      %90 = vmatpush.msra.mxu0 %v83
      %91 = vmatpush.msra.mxu0 %v82
      %92 = vmatpush.msra.mxu0 %v81
      %93 = vmatpush.msra.mxu0 %v80
      %94 = vmatpush.msra.mxu0 %v79
      %95 = vmatpush.msra.mxu0 %v78
      %96 = vmatpush.msra.mxu0 %v77
      %97 = vmatpush.msra.mxu0 %v76
      %98 = vmatpush.msra.mxu0 %v75
      %99 = vmatpush.msra.mxu0 %v74
      %100 = vmatpush.msra.mxu0 %v73
      %101 = vmatpush.msra.mxu0 %v72
      %102 = vmatpush.msra.mxu0 %v71
      %103 = vmatmul.f32.gmra.mxu0 %v66
      %v104 = vpop.f32.mrf.mxu0
      %v105 = vadd.f32 0.0, %v104
      %106 = vmatmul.f32.gmra.mxu0 %v67
      %v107 = vpop.f32.mrf.mxu0
      %v108 = vadd.f32 0.0, %v107
      %109 = vdwg.mxu0
      %110 = vmatpush.msra.mxu0 %v65
      %111 = vmatpush.msra.mxu0 %v64
      %112 = vmatpush.msra.mxu0 %v63
      %113 = vmatpush.msra.mxu0 %v62
      %114 = vmatpush.msra.mxu0 %v61
      %115 = vmatpush.msra.mxu0 %v60
      %116 = vmatpush.msra.mxu0 %v59
      %117 = vmatpush.msra.mxu0 %v58
      %118 = vmatpush.msra.mxu0 %v57
      %119 = vmatpush.msra.mxu0 %v56
      %120 = vmatpush.msra.mxu0 %v55
      %121 = vmatpush.msra.mxu0 %v54
      %122 = vmatpush.msra.mxu0 %v53
      %123 = vmatpush.msra.mxu0 %v52
      %124 = vmatpush.msra.mxu0 %v51
      %125 = vmatpush.msra.mxu0 %v50
      %126 = vmatmul.f32.gmra.mxu0 %v45
      %v127 = vpop.f32.mrf.mxu0
      %v128 = vadd.f32 %v105, %v127
      %129 = vmatmul.f32.gmra.mxu0 %v46
      %v130 = vpop.f32.mrf.mxu0
      %v131 = vadd.f32 %v108, %v130
      %132 = vdwg.mxu0
      %v133 = vld [vmem:[#allocation2 + $0x2] sm:$0xff]
      %v134 = vld [vmem:[#allocation2 + $0xa] sm:$0xff]
      %s135 = sadd.s32 %s47, 2
      %s136 = smul.u32 %s135, 128
      %s137 = scalar_lea.vmem [#allocation4], %s136
      %v138 = vld [vmem:[%s137] sm:$0xff]
      %v139 = vld [vmem:[%s137 + $0x8] sm:$0xff]
      %v140 = vld [vmem:[%s137 + $0x10] sm:$0xff]
      %v141 = vld [vmem:[%s137 + $0x18] sm:$0xff]
      %v142 = vld [vmem:[%s137 + $0x20] sm:$0xff]
      %v143 = vld [vmem:[%s137 + $0x28] sm:$0xff]
      %v144 = vld [vmem:[%s137 + $0x30] sm:$0xff]
      %v145 = vld [vmem:[%s137 + $0x38] sm:$0xff]
      %v146 = vld [vmem:[%s137 + $0x40] sm:$0xff]
      %v147 = vld [vmem:[%s137 + $0x48] sm:$0xff]
      %v148 = vld [vmem:[%s137 + $0x50] sm:$0xff]
      %v149 = vld [vmem:[%s137 + $0x58] sm:$0xff]
      %v150 = vld [vmem:[%s137 + $0x60] sm:$0xff]
      %v151 = vld [vmem:[%s137 + $0x68] sm:$0xff]
      %v152 = vld [vmem:[%s137 + $0x70] sm:$0xff]
      %v153 = vld [vmem:[%s137 + $0x78] sm:$0xff]
      %154 = vmatpush.msra.mxu0 %v153
      %155 = vmatpush.msra.mxu0 %v152
      %156 = vmatpush.msra.mxu0 %v151
      %157 = vmatpush.msra.mxu0 %v150
      %158 = vmatpush.msra.mxu0 %v149
      %159 = vmatpush.msra.mxu0 %v148
      %160 = vmatpush.msra.mxu0 %v147
      %161 = vmatpush.msra.mxu0 %v146
      %162 = vmatpush.msra.mxu0 %v145
      %163 = vmatpush.msra.mxu0 %v144
      %164 = vmatpush.msra.mxu0 %v143
      %165 = vmatpush.msra.mxu0 %v142
      %166 = vmatpush.msra.mxu0 %v141
      %167 = vmatpush.msra.mxu0 %v140
      %168 = vmatpush.msra.mxu0 %v139
      %169 = vmatpush.msra.mxu0 %v138
      %170 = vmatmul.f32.gmra.mxu0 %v133
      %v171 = vpop.f32.mrf.mxu0
      %v172 = vadd.f32 0.0, %v171
      %173 = vmatmul.f32.gmra.mxu0 %v134
      %v174 = vpop.f32.mrf.mxu0
      %v175 = vadd.f32 0.0, %v174
      %176 = vdwg.mxu0
      %v177 = vadd.f32 %v128, %v172
      %v178 = vadd.f32 %v131, %v175
      %s179 = scalar_lea.vmem %s2, %s44
      %v180 = vld [vmem:[%s179] sm:$0x1]
      %v182 = vperm.slane %v180, 0
      %v184 = vadd.f32 %v177, %v182
      %v185 = vadd.f32 %v178, %v182
      %v186 = vmax.f32 %v184, 0.0
      %v187 = vmax.f32 %v185, 0.0
      %188 = vst [vmem:[#allocation3 + $0x1] sm:$0xff] %v186
      %189 = vst [vmem:[#allocation3 + $0x9] sm:$0xff] %v187
      %s190 = sadd.s32 %s44, 1
      %v191 = vld [vmem:[#allocation3] sm:$0xff]
      %v192 = vld [vmem:[#allocation3 + $0x8] sm:$0xff]
      %s193 = smul.u32 %s190, 3
      %s194 = smul.u32 %s193, 128
      %s195 = scalar_lea.vmem [#allocation4], %s194
      %v196 = vld [vmem:[%s195] sm:$0xff]
      %v197 = vld [vmem:[%s195 + $0x8] sm:$0xff]
      %v198 = vld [vmem:[%s195 + $0x10] sm:$0xff]
      %v199 = vld [vmem:[%s195 + $0x18] sm:$0xff]
      %v200 = vld [vmem:[%s195 + $0x20] sm:$0xff]
      %v201 = vld [vmem:[%s195 + $0x28] sm:$0xff]
      %v202 = vld [vmem:[%s195 + $0x30] sm:$0xff]
      %v203 = vld [vmem:[%s195 + $0x38] sm:$0xff]
      %v204 = vld [vmem:[%s195 + $0x40] sm:$0xff]
      %v205 = vld [vmem:[%s195 + $0x48] sm:$0xff]
      %v206 = vld [vmem:[%s195 + $0x50] sm:$0xff]
      %v207 = vld [vmem:[%s195 + $0x58] sm:$0xff]
      %v208 = vld [vmem:[%s195 + $0x60] sm:$0xff]
      %v209 = vld [vmem:[%s195 + $0x68] sm:$0xff]
      %v210 = vld [vmem:[%s195 + $0x70] sm:$0xff]
      %v211 = vld [vmem:[%s195 + $0x78] sm:$0xff]
      %v212 = vld [vmem:[#allocation3 + $0x1] sm:$0xff]
      %v213 = vld [vmem:[#allocation3 + $0x9] sm:$0xff]
      %s214 = sadd.s32 %s193, 1
      %s215 = smul.u32 %s214, 128
      %s216 = scalar_lea.vmem [#allocation4], %s215
      %v217 = vld [vmem:[%s216] sm:$0xff]
      %v218 = vld [vmem:[%s216 + $0x8] sm:$0xff]
      %v219 = vld [vmem:[%s216 + $0x10] sm:$0xff]
      %v220 = vld [vmem:[%s216 + $0x18] sm:$0xff]
      %v221 = vld [vmem:[%s216 + $0x20] sm:$0xff]
      %v222 = vld [vmem:[%s216 + $0x28] sm:$0xff]
      %v223 = vld [vmem:[%s216 + $0x30] sm:$0xff]
      %v224 = vld [vmem:[%s216 + $0x38] sm:$0xff]
      %v225 = vld [vmem:[%s216 + $0x40] sm:$0xff]
      %v226 = vld [vmem:[%s216 + $0x48] sm:$0xff]
      %v227 = vld [vmem:[%s216 + $0x50] sm:$0xff]
      %v228 = vld [vmem:[%s216 + $0x58] sm:$0xff]
      %v229 = vld [vmem:[%s216 + $0x60] sm:$0xff]
      %v230 = vld [vmem:[%s216 + $0x68] sm:$0xff]
      %v231 = vld [vmem:[%s216 + $0x70] sm:$0xff]
      %v232 = vld [vmem:[%s216 + $0x78] sm:$0xff]
      %233 = vmatpush.msra.mxu0 %v232
      %234 = vmatpush.msra.mxu0 %v231
      %235 = vmatpush.msra.mxu0 %v230
      %236 = vmatpush.msra.mxu0 %v229
      %237 = vmatpush.msra.mxu0 %v228
      %238 = vmatpush.msra.mxu0 %v227
      %239 = vmatpush.msra.mxu0 %v226
      %240 = vmatpush.msra.mxu0 %v225
      %241 = vmatpush.msra.mxu0 %v224
      %242 = vmatpush.msra.mxu0 %v223
      %243 = vmatpush.msra.mxu0 %v222
      %244 = vmatpush.msra.mxu0 %v221
      %245 = vmatpush.msra.mxu0 %v220
      %246 = vmatpush.msra.mxu0 %v219
      %247 = vmatpush.msra.mxu0 %v218
      %248 = vmatpush.msra.mxu0 %v217
      %249 = vmatmul.f32.gmra.mxu0 %v212
      %v250 = vpop.f32.mrf.mxu0
      %v251 = vadd.f32 0.0, %v250
      %252 = vmatmul.f32.gmra.mxu0 %v213
      %v253 = vpop.f32.mrf.mxu0
      %v254 = vadd.f32 0.0, %v253
      %255 = vdwg.mxu0
      %256 = vmatpush.msra.mxu0 %v211
      %257 = vmatpush.msra.mxu0 %v210
      %258 = vmatpush.msra.mxu0 %v209
      %259 = vmatpush.msra.mxu0 %v208
      %260 = vmatpush.msra.mxu0 %v207
      %261 = vmatpush.msra.mxu0 %v206
      %262 = vmatpush.msra.mxu0 %v205
      %263 = vmatpush.msra.mxu0 %v204
      %264 = vmatpush.msra.mxu0 %v203
      %265 = vmatpush.msra.mxu0 %v202
      %266 = vmatpush.msra.mxu0 %v201
      %267 = vmatpush.msra.mxu0 %v200
      %268 = vmatpush.msra.mxu0 %v199
      %269 = vmatpush.msra.mxu0 %v198
      %270 = vmatpush.msra.mxu0 %v197
      %271 = vmatpush.msra.mxu0 %v196
      %272 = vmatmul.f32.gmra.mxu0 %v191
      %v273 = vpop.f32.mrf.mxu0
      %v274 = vadd.f32 %v251, %v273
      %275 = vmatmul.f32.gmra.mxu0 %v192
      %v276 = vpop.f32.mrf.mxu0
      %v277 = vadd.f32 %v254, %v276
      %278 = vdwg.mxu0
      %v279 = vld [vmem:[#allocation3 + $0x2] sm:$0xff]
      %v280 = vld [vmem:[#allocation3 + $0xa] sm:$0xff]
      %s281 = sadd.s32 %s193, 2
      %s282 = smul.u32 %s281, 128
      %s283 = scalar_lea.vmem [#allocation4], %s282
      %v284 = vld [vmem:[%s283] sm:$0xff]
      %v285 = vld [vmem:[%s283 + $0x8] sm:$0xff]
      %v286 = vld [vmem:[%s283 + $0x10] sm:$0xff]
      %v287 = vld [vmem:[%s283 + $0x18] sm:$0xff]
      %v288 = vld [vmem:[%s283 + $0x20] sm:$0xff]
      %v289 = vld [vmem:[%s283 + $0x28] sm:$0xff]
      %v290 = vld [vmem:[%s283 + $0x30] sm:$0xff]
      %v291 = vld [vmem:[%s283 + $0x38] sm:$0xff]
      %v292 = vld [vmem:[%s283 + $0x40] sm:$0xff]
      %v293 = vld [vmem:[%s283 + $0x48] sm:$0xff]
      %v294 = vld [vmem:[%s283 + $0x50] sm:$0xff]
      %v295 = vld [vmem:[%s283 + $0x58] sm:$0xff]
      %v296 = vld [vmem:[%s283 + $0x60] sm:$0xff]
      %v297 = vld [vmem:[%s283 + $0x68] sm:$0xff]
      %v298 = vld [vmem:[%s283 + $0x70] sm:$0xff]
      %v299 = vld [vmem:[%s283 + $0x78] sm:$0xff]
      %300 = vmatpush.msra.mxu0 %v299
      %301 = vmatpush.msra.mxu0 %v298
      %302 = vmatpush.msra.mxu0 %v297
      %303 = vmatpush.msra.mxu0 %v296
      %304 = vmatpush.msra.mxu0 %v295
      %305 = vmatpush.msra.mxu0 %v294
      %306 = vmatpush.msra.mxu0 %v293
      %307 = vmatpush.msra.mxu0 %v292
      %308 = vmatpush.msra.mxu0 %v291
      %309 = vmatpush.msra.mxu0 %v290
      %310 = vmatpush.msra.mxu0 %v289
      %311 = vmatpush.msra.mxu0 %v288
      %312 = vmatpush.msra.mxu0 %v287
      %313 = vmatpush.msra.mxu0 %v286
      %314 = vmatpush.msra.mxu0 %v285
      %315 = vmatpush.msra.mxu0 %v284
      %316 = vmatmul.f32.gmra.mxu0 %v279
      %v317 = vpop.f32.mrf.mxu0
      %v318 = vadd.f32 0.0, %v317
      %319 = vmatmul.f32.gmra.mxu0 %v280
      %v320 = vpop.f32.mrf.mxu0
      %v321 = vadd.f32 0.0, %v320
      %322 = vdwg.mxu0
      %v323 = vadd.f32 %v274, %v318
      %v324 = vadd.f32 %v277, %v321
      %s325 = scalar_lea.vmem %s2, %s190
      %v326 = vld [vmem:[%s325] sm:$0x1]
      %v328 = vperm.slane %v326, 0
      %v330 = vadd.f32 %v323, %v328
      %v331 = vadd.f32 %v324, %v328
      %v332 = vld [vmem:[#allocation2 + $0x1] sm:$0xff]
      %v333 = vld [vmem:[#allocation2 + $0x9] sm:$0xff]
      %v334 = vadd.f32 %v330, %v332
      %v335 = vadd.f32 %v331, %v333
      %336 = vst [vmem:[#allocation2 + $0x1] sm:$0xff] %v334
      %337 = vst [vmem:[#allocation2 + $0x9] sm:$0xff] %v335
    $region22: #{eblock_forward_packed.1} parent=1 // loop_footer
      %s43 = sadd.s32 1, %s39
    $region23: #{eblock_forward_packed.1} parent=1 // loop_footer_branch
      %38 = sbr.rel target = $region19
    $region24: #{eblock_forward_packed.1} parent=1 // loop_exit
      _
    %v338 = vld [vmem:[#allocation2 + $0x1] sm:$0xff]
    %v339 = vld [vmem:[#allocation2 + $0x9] sm:$0xff]
    %340 = vst [vmem:[%s3] sm:$0xff] %v338
    %341 = vst [vmem:[%s3 + $0x8] sm:$0xff] %v339
    // Predicated region
    $region25: #{eblock_forward_packed.1} parent=1 // pred_check
      _
    $region26: #{eblock_forward_packed.1} parent=1 // pred_check_branch
      %343 = sbr.rel (0) target = $region28
    $region27: #{eblock_forward_packed.1} parent=1 // pred_region
      _
    $region28: #{eblock_forward_packed.1} parent=1 // pred_fallthru
      _
    // Predicated region
    $region29: #{eblock_forward_packed.1} parent=1 // pred_check
      _
    $region30: #{eblock_forward_packed.1} parent=1 // pred_check_branch
      %345 = sbr.rel (0) target = $region32
    $region31: #{eblock_forward_packed.1} parent=1 // pred_region
      _
    $region32: #{eblock_forward_packed.1} parent=1 // pred_fallthru
      _
    %346 = vsyncpa [#allocation5], 1

</llo_original>
